<compile_context>
chip_gen: v6e
topology: v6e:2x2x1
jax: 0.10.0
libtpu: 0.0.40
codegen_flags: <defaults>
</compile_context>

<pallas_src>
import jax
import jax.numpy as jnp
from jax import lax
from jax.experimental import pallas as pl
from jax.experimental.pallas import tpu as pltpu


def _make_cbow_kernel(tn):
    """Kernel body; closes over the static vocab tile width `tn`."""

    def kernel(ctx_ref,    # (B_pad, D)     bf16  VMEM-resident bag-of-words sums
               w_ref,      # (TN, D)        bf16  streamed weight tile
               b_ref,      # (1, TN)        f32   streamed bias tile
               out_ref,    # (B_pad, V_pad) f32   VMEM-resident logits / output
               m_ref,      # (B_pad, 1)     f32   scratch: running max
               s_ref):     # (B_pad, 1)     f32   scratch: running sum(exp)
        j = pl.program_id(0)
        nv = pl.num_programs(0)

        @pl.when(j == 0)
        def _():
            m_ref[...] = jnp.full_like(m_ref, -jnp.inf)
            s_ref[...] = jnp.zeros_like(s_ref)

        # (B_pad, TN) logits for this vocab tile. The MXU contracts the D axes
        # directly (no wrapper-side transpose); bf16 operands, f32 accumulate.
        logits = lax.dot_general(
            ctx_ref[...], w_ref[...],
            dimension_numbers=(((1,), (1,)), ((), ())),
            preferred_element_type=jnp.float32) + b_ref[...]
        # Padded vocab columns already carry a -1e30 bias (zero weight rows),
        # so no explicit masking is needed here.

        # Online logsumexp accumulation across vocab tiles.
        t_max = jnp.max(logits, axis=-1, keepdims=True)
        m_new = jnp.maximum(m_ref[...], t_max)
        s_ref[...] = (s_ref[...] * jnp.exp(m_ref[...] - m_new)
                      + jnp.sum(jnp.exp(logits - m_new), axis=-1, keepdims=True))
        m_ref[...] = m_new

        # Stash unnormalized logits into the resident output block (lane-aligned).
        col0 = pl.multiple_of(j * tn, tn)
        out_ref[:, pl.ds(col0, tn)] = logits

        # Last tile: normalize the entire resident block in place.
        @pl.when(j == nv - 1)
        def _():
            out_ref[...] = out_ref[...] - (m_ref[...] + jnp.log(s_ref[...]))

    return kernel


def cbow_forward(inputs, embeddings, linear_w, linear_b, *, tn=512):
    """inputs (B, C) int indices; embeddings (V, D); linear_w (V, D); linear_b (V,).
    Returns (B, V) float32 log-probabilities (log_softmax of the CBOW logits)."""
    B, C = inputs.shape
    V, D = embeddings.shape
    assert linear_w.shape == (V, D) and linear_b.shape == (V,)

    B_pad = ((B + 7) // 8) * 8                  # fill MXU sublane rows
    tn = max(128, (tn // 128) * 128)            # lane-dense tile width
    v128 = ((V + 127) // 128) * 128
    tn = min(tn, v128)                          # don't tile wider than the vocab
    V_pad = ((V + tn - 1) // tn) * tn
    NV = V_pad // tn

    # Clamp indices (no runtime OOB check on gathers).
    idx = jnp.clip(inputs.astype(jnp.int32), 0, V - 1)

    # Embedding gather + bag-of-words sum in the wrapper (XLA): only B*C rows,
    # negligible next to the (V, D) weight stream; lets the weight-tile pipeline
    # start immediately (perf review, opt 6). bf16 storage, f32 accumulation.
    emb_bf16 = embeddings.astype(jnp.bfloat16)
    ctx = jnp.sum(emb_bf16[idx].astype(jnp.float32), axis=1)          # (B, D)
    ctx = jnp.pad(ctx, ((0, B_pad - B), (0, 0))).astype(jnp.bfloat16)  # (B_pad, D)

    # Weight streamed from HBM in bf16 (halves the dominant stream); bias f32.
    # Padded vocab columns: zero weight rows + -1e30 bias bake the column mask
    # into the data, so the kernel needs no iota/compare/select.
    w = linear_w.astype(jnp.bfloat16)
    b = linear_b.astype(jnp.float32).reshape(1, V)
    if V_pad != V:
        w = jnp.pad(w, ((0, V_pad - V), (0, 0)))
        b = jnp.pad(b, ((0, 0), (0, V_pad - V)), constant_values=-1e30)

    kernel = _make_cbow_kernel(tn)

    grid_spec = pltpu.PrefetchScalarGridSpec(
        num_scalar_prefetch=0,
        grid=(NV,),                                            # vocab tiles
        in_specs=[
            pl.BlockSpec((B_pad, D), lambda j: (0, 0)),        # ctx (resident)
            pl.BlockSpec((tn, D), lambda j: (j, 0)),           # weight tile
            pl.BlockSpec((1, tn), lambda j: (0, j)),           # bias tile
        ],
        out_specs=pl.BlockSpec((B_pad, V_pad), lambda j: (0, 0)),  # resident logits
        scratch_shapes=[
            pltpu.VMEM((B_pad, 1), jnp.float32),               # running max
            pltpu.VMEM((B_pad, 1), jnp.float32),               # running sum(exp)
        ],
    )

    # VMEM budget: resident logits + resident ctx + double-buffered streamed tiles.
    vmem_needed = (B_pad * V_pad * 4
                   + B_pad * D * 2
                   + 2 * tn * D * 2
                   + 2 * tn * 4
                   + 2 * B_pad * 4)
    vmem_limit = int(min(100 * 1024 * 1024,
                         max(32 * 1024 * 1024, 2 * vmem_needed)))

    cost = pl.CostEstimate(
        flops=2 * B_pad * D * V_pad,               # weight multiplied exactly once
        transcendentals=B_pad * V_pad,             # exp per logit
        bytes_accessed=(V_pad * D * 2              # bf16 weight, streamed once
                        + V_pad * 4                # f32 bias
                        + B_pad * V_pad * 4        # f32 output, written once
                        + B_pad * D * 2),          # bf16 ctx
    )

    out = pl.pallas_call(
        kernel,
        out_shape=jax.ShapeDtypeStruct((B_pad, V_pad), jnp.float32),
        grid_spec=grid_spec,
        compiler_params=pltpu.CompilerParams(
            # Single grid axis carries the logsumexp reduction through scratch.
            dimension_semantics=("arbitrary",),
            vmem_limit_bytes=vmem_limit),
        cost_estimate=cost,
    )(ctx, w, b)

    return out[:B, :V]


def cbow_reference(inputs, embeddings, linear_w, linear_b):
    """Pure-JAX full-f32 reference (original module semantics)."""
    e = embeddings[inputs]                       # (B, C, D)
    s = e.sum(axis=1)                            # (B, D)
    logits = s @ linear_w.T + linear_b           # (B, V)
    return jax.nn.log_softmax(logits, axis=-1)


def cbow_reference_quantized(inputs, embeddings, linear_w, linear_b):
    """Reference matching the kernel's bf16 storage / f32 accumulation."""
    emb_q = embeddings.astype(jnp.bfloat16).astype(jnp.float32)
    ctx = emb_q[inputs].sum(axis=1).astype(jnp.bfloat16).astype(jnp.float32)
    w_q = linear_w.astype(jnp.bfloat16).astype(jnp.float32)
    logits = ctx @ w_q.T + linear_b.astype(jnp.float32)
    return jax.nn.log_softmax(logits, axis=-1)


if __name__ == "__main__":
    vocab_size = 500          # padded to 512 (one 512-wide lane-dense vocab tile)
    embedding_dim = 64
    batch = 3                 # padded to 8 MXU sublane rows in the wrapper
    context = 4               # e.g. CONTEXT_SIZE = 2 on each side

    key = jax.random.PRNGKey(0)
    k_emb, k_w, k_b, k_idx = jax.random.split(key, 4)

    embeddings = jax.random.normal(k_emb, (vocab_size, embedding_dim), jnp.float32)
    linear_w = jax.random.normal(k_w, (vocab_size, embedding_dim), jnp.float32) * 0.1
    linear_b = jax.random.normal(k_b, (vocab_size,), jnp.float32) * 0.1

    inputs = jax.random.randint(k_idx, (batch, context), 0, vocab_size, jnp.int32)

    out = cbow_forward(inputs, embeddings, linear_w, linear_b)
    out = jax.block_until_ready(out)
    assert out.shape == (batch, vocab_size)

    # Primary correctness check: same bf16 quantization, f32 accumulation.
    ref_q = cbow_reference_quantized(inputs, embeddings, linear_w, linear_b)
    assert jnp.allclose(out, ref_q, atol=1e-4, rtol=1e-4), "mismatch vs bf16-quantized reference"

    # Sanity check vs the full-f32 module semantics (bf16 weight storage adds ~1e-2 logit noise).
    ref = cbow_reference(inputs, embeddings, linear_w, linear_b)
    assert jnp.allclose(out, ref, atol=2.5e-1), "mismatch vs f32 reference"

    print("KERNEL_OK")
</pallas_src>

<mosaic_0001>
module attributes {stable_mosaic.version = 11 : i64} {
  func.func @kernel(%arg0: i32, %arg1: memref<8x64xbf16, #tpu.memory_space<vmem>>, %arg2: memref<512x64xbf16, #tpu.memory_space<vmem>>, %arg3: memref<1x512xf32, #tpu.memory_space<vmem>>, %arg4: memref<8x512xf32, #tpu.memory_space<vmem>>, %arg5: memref<8x1xf32, #tpu.memory_space<vmem>>, %arg6: memref<8x1xf32, #tpu.memory_space<vmem>>) attributes {dimension_semantics = [#tpu.dimension_semantics<arbitrary>], iteration_bounds = array<i64: 1>, scalar_prefetch = 0 : i64, scratch_operands = 2 : i64, tpu.core_type = #tpu.core_type<tc>, window_params = [{pipeline_mode = #tpu.pipeline_mode<synchronous>, transform_indices = @transform_0, window_bounds = array<i64: 8, 64>}, {transform_indices = @transform_1, window_bounds = array<i64: 512, 64>}, {transform_indices = @transform_2, window_bounds = array<i64: 1, 512>}, {pipeline_mode = #tpu.pipeline_mode<synchronous>, transform_indices = @transform_3, window_bounds = array<i64: 8, 512>}]} {
    %c0_i32 = arith.constant 0 : i32
    %0 = arith.cmpi eq, %arg0, %c0_i32 : i32
    %1 = arith.extui %0 : i1 to i32
    %c0_i32_0 = arith.constant 0 : i32
    %2 = arith.cmpi ne, %1, %c0_i32_0 : i32
    scf.if %2 {
      %cst_21 = arith.constant 0xFF800000 : f32
      %33 = vector.broadcast %cst_21 : f32 to vector<8x1xf32>
      %c0_22 = arith.constant 0 : index
      %c0_23 = arith.constant 0 : index
      %34 = vector.load %arg5[%c0_22, %c0_23] : memref<8x1xf32, #tpu.memory_space<vmem>>, vector<8x1xf32>
      tpu.vector_store %arg5[%c0_22, %c0_23], %33 {strides = array<i32>} : memref<8x1xf32, #tpu.memory_space<vmem>>, vector<8x1xf32>,
      %cst_24 = arith.constant 0.000000e+00 : f32
      %35 = vector.broadcast %cst_24 : f32 to vector<8x1xf32>
      %c0_25 = arith.constant 0 : index
      %c0_26 = arith.constant 0 : index
      %36 = vector.load %arg6[%c0_25, %c0_26] : memref<8x1xf32, #tpu.memory_space<vmem>>, vector<8x1xf32>
      tpu.vector_store %arg6[%c0_25, %c0_26], %35 {strides = array<i32>} : memref<8x1xf32, #tpu.memory_space<vmem>>, vector<8x1xf32>,
    } else {
    }
    %c0 = arith.constant 0 : index
    %c0_1 = arith.constant 0 : index
    %3 = vector.load %arg1[%c0, %c0_1] : memref<8x64xbf16, #tpu.memory_space<vmem>>, vector<8x64xbf16>
    %c0_2 = arith.constant 0 : index
    %c0_3 = arith.constant 0 : index
    %4 = vector.load %arg2[%c0_2, %c0_3] : memref<512x64xbf16, #tpu.memory_space<vmem>>, vector<512x64xbf16>
    %cst = arith.constant dense<0.000000e+00> : vector<8x512xf32>
    %5 = tpu.matmul %3, %4, %cst {dimension_numbers = #tpu.dot_dimension_numbers<[1], [1], [0], [0], [0, 0, 1, 0], [], []>} : vector<8x64xbf16>, vector<512x64xbf16>, vector<8x512xf32> -> vector<8x512xf32>
    %c0_4 = arith.constant 0 : index
    %c0_5 = arith.constant 0 : index
    %6 = vector.load %arg3[%c0_4, %c0_5] : memref<1x512xf32, #tpu.memory_space<vmem>>, vector<1x512xf32>
    %7 = vector.broadcast %6 : vector<1x512xf32> to vector<8x512xf32>
    %8 = arith.addf %5, %7 : vector<8x512xf32>
    %cst_6 = arith.constant dense<0xFF800000> : vector<8xf32>
    %9 = vector.multi_reduction <maximumf>, %8, %cst_6 [1] : vector<8x512xf32> to vector<8xf32>
    %10 = vector.shape_cast %9 : vector<8xf32> to vector<8x1xf32>
    %c0_7 = arith.constant 0 : index
    %c0_8 = arith.constant 0 : index
    %11 = vector.load %arg5[%c0_7, %c0_8] : memref<8x1xf32, #tpu.memory_space<vmem>>, vector<8x1xf32>
    %12 = arith.maximumf %11, %10 : vector<8x1xf32>
    %c0_9 = arith.constant 0 : index
    %c0_10 = arith.constant 0 : index
    %13 = vector.load %arg6[%c0_9, %c0_10] : memref<8x1xf32, #tpu.memory_space<vmem>>, vector<8x1xf32>
    %c0_11 = arith.constant 0 : index
    %c0_12 = arith.constant 0 : index
    %14 = vector.load %arg5[%c0_11, %c0_12] : memref<8x1xf32, #tpu.memory_space<vmem>>, vector<8x1xf32>
    %15 = arith.subf %14, %12 : vector<8x1xf32>
    %16 = math.exp %15 : vector<8x1xf32>
    %17 = arith.mulf %13, %16 : vector<8x1xf32>
    %18 = vector.broadcast %12 : vector<8x1xf32> to vector<8x512xf32>
    %19 = arith.subf %8, %18 : vector<8x512xf32>
    %20 = math.exp %19 : vector<8x512xf32>
    %cst_13 = arith.constant dense<0.000000e+00> : vector<8xf32>
    %21 = vector.multi_reduction <add>, %20, %cst_13 [1] : vector<8x512xf32> to vector<8xf32>
    %22 = vector.shape_cast %21 : vector<8xf32> to vector<8x1xf32>
    %23 = arith.addf %17, %22 : vector<8x1xf32>
    %c0_14 = arith.constant 0 : index
    %c0_15 = arith.constant 0 : index
    %24 = vector.load %arg6[%c0_14, %c0_15] : memref<8x1xf32, #tpu.memory_space<vmem>>, vector<8x1xf32>
    tpu.vector_store %arg6[%c0_14, %c0_15], %23 {strides = array<i32>} : memref<8x1xf32, #tpu.memory_space<vmem>>, vector<8x1xf32>,
    %c0_16 = arith.constant 0 : index
    %c0_17 = arith.constant 0 : index
    %25 = vector.load %arg5[%c0_16, %c0_17] : memref<8x1xf32, #tpu.memory_space<vmem>>, vector<8x1xf32>
    tpu.vector_store %arg5[%c0_16, %c0_17], %12 {strides = array<i32>} : memref<8x1xf32, #tpu.memory_space<vmem>>, vector<8x1xf32>,
    %c512_i32 = arith.constant 512 : i32
    %26 = arith.muli %arg0, %c512_i32 : i32
    %27 = tpu.assume_multiple %26, 512 : i32
    %c0_18 = arith.constant 0 : index
    %28 = arith.index_cast %27 : i32 to index
    %29 = vector.load %arg4[%c0_18, %28] : memref<8x512xf32, #tpu.memory_space<vmem>>, vector<8x512xf32>
    tpu.vector_store %arg4[%c0_18, %28], %8 {strides = array<i32>} : memref<8x512xf32, #tpu.memory_space<vmem>>, vector<8x512xf32>,
    %c0_i32_19 = arith.constant 0 : i32
    %30 = arith.cmpi eq, %arg0, %c0_i32_19 : i32
    %31 = arith.extui %30 : i1 to i32
    %c0_i32_20 = arith.constant 0 : i32
    %32 = arith.cmpi ne, %31, %c0_i32_20 : i32
    scf.if %32 {
      %c0_21 = arith.constant 0 : index
      %c0_22 = arith.constant 0 : index
      %33 = vector.load %arg4[%c0_21, %c0_22] : memref<8x512xf32, #tpu.memory_space<vmem>>, vector<8x512xf32>
      %c0_23 = arith.constant 0 : index
      %c0_24 = arith.constant 0 : index
      %34 = vector.load %arg5[%c0_23, %c0_24] : memref<8x1xf32, #tpu.memory_space<vmem>>, vector<8x1xf32>
      %c0_25 = arith.constant 0 : index
      %c0_26 = arith.constant 0 : index
      %35 = vector.load %arg6[%c0_25, %c0_26] : memref<8x1xf32, #tpu.memory_space<vmem>>, vector<8x1xf32>
      %36 = math.log %35 : vector<8x1xf32>
      %37 = arith.addf %34, %36 : vector<8x1xf32>
      %38 = vector.broadcast %37 : vector<8x1xf32> to vector<8x512xf32>
      %39 = arith.subf %33, %38 : vector<8x512xf32>
      %c0_27 = arith.constant 0 : index
      %c0_28 = arith.constant 0 : index
      %40 = vector.load %arg4[%c0_27, %c0_28] : memref<8x512xf32, #tpu.memory_space<vmem>>, vector<8x512xf32>
      tpu.vector_store %arg4[%c0_27, %c0_28], %39 {strides = array<i32>} : memref<8x512xf32, #tpu.memory_space<vmem>>, vector<8x512xf32>,
    } else {
    }
    return
  }
  func.func @transform_0(%arg0: i32) -> (i32, i32) {
    %c0_i32 = arith.constant 0 : i32
    %c0_i32_0 = arith.constant 0 : i32
    %c0_i32_1 = arith.constant 0 : i32
    return %c0_i32, %c0_i32_0 : i32, i32
  }
  func.func @transform_1(%arg0: i32) -> (i32, i32) {
    %c0_i32 = arith.constant 0 : i32
    %c0_i32_0 = arith.constant 0 : i32
    return %arg0, %c0_i32 : i32, i32
  }
  func.func @transform_2(%arg0: i32) -> (i32, i32) {
    %c0_i32 = arith.constant 0 : i32
    %c0_i32_0 = arith.constant 0 : i32
    return %c0_i32, %arg0 : i32, i32
  }
  func.func @transform_3(%arg0: i32) -> (i32, i32) {
    %c0_i32 = arith.constant 0 : i32
    %c0_i32_0 = arith.constant 0 : i32
    %c0_i32_1 = arith.constant 0 : i32
    return %c0_i32, %c0_i32_0 : i32, i32
  }
}

</mosaic_0001>

<llo_original>
// kernel: tpu_custom_call.1
$region0: #{tpu_custom_call.1}
  #allocation0 [shape = 'u32[]', space=smem, size = 0x4, offset = 0x4, fixed_abs, tag = 'smem constant byte address 0x4 - core index']
  #allocation1 [shape = 'u32[144,128]{1,0:T(1,128)}', space=vmem, size = 0x12000, scoped, tag = 'internal scratch']
  #allocation2 [shape = 'f32[8,1]{1,0:T(8,128)}', space=vmem, size = 0x1000, scoped, tag = 'scratch operand']
  #allocation3 [shape = 'f32[8,1]{1,0:T(8,128)}', space=vmem, size = 0x1000, scoped, tag = 'scratch operand']
  %s0 = inlined_call_operand.vmem [shape: bf16[8,64], index: 0, kind: input, shape index: {}]
  %s1 = inlined_call_operand.vmem [shape: bf16[512,64], index: 1, kind: input, shape index: {}]
  %s2 = inlined_call_operand.vmem [shape: f32[1,512], index: 2, kind: input, shape index: {}]
  %s3 = inlined_call_operand.hbm [shape: f32[8,512], index: 3, kind: output, shape index: {}]
  %s4 = sld [smem:[#allocation0]]
  $region30: #{tpu_custom_call.1} parent=0
    _
  %s6 = ssub.s32 1, %s4
  %s7 = scalar_select 0, %s6, %s4
  $region1: #{tpu_custom_call.1} parent=0
    #allocation4 [shape = 'u8[16384]{0}', space=vmem, size = 0x4000, scoped, tag = 'output window, operand 0, single buffered']
    #allocation5 [shape = 's32[1]{0}', space=sflag, size = 0x4, scoped, tag = 'scoped memory for tpu_custom_call.1']
    %8 = vsyncpa [#allocation5], 0
    // Predicated region
    $region2: #{tpu_custom_call.1} parent=1 // pred_check
      _
    $region3: #{tpu_custom_call.1} parent=1 // pred_check_branch
      %10 = sbr.rel (0) target = $region5
    $region4: #{tpu_custom_call.1} parent=1 // pred_region
      _
    $region5: #{tpu_custom_call.1} parent=1 // pred_fallthru
      _
    // Predicated region
    $region6: #{tpu_custom_call.1} parent=1 // pred_check
      _
    $region7: #{tpu_custom_call.1} parent=1 // pred_check_branch
      %12 = sbr.rel (0) target = $region9
    $region8: #{tpu_custom_call.1} parent=1 // pred_region
      _
    $region9: #{tpu_custom_call.1} parent=1 // pred_fallthru
      _
    // Predicated region
    $region10: #{tpu_custom_call.1} parent=1 // pred_check
      _
    $region11: #{tpu_custom_call.1} parent=1 // pred_check_branch
      %14 = sbr.rel (0) target = $region13
    $region12: #{tpu_custom_call.1} parent=1 // pred_region
      _
    $region13: #{tpu_custom_call.1} parent=1 // pred_fallthru
      _
    %p16 = scmp.eq.s32.totalorder 0, 0
    // Predicated region
    $region14: #{tpu_custom_call.1} parent=1 // pred_check
      %p17 = pneg %p16
    $region15: #{tpu_custom_call.1} parent=1 // pred_check_branch
      %19 = sbr.rel (%p17) target = $region17
    $region16: #{tpu_custom_call.1} parent=1 // pred_region
      %vm20 = vcmask 7168
      %21 = vst.msk [vmem:[#allocation2] sm:$0xff] %vm20, -inf
      %22 = vst.msk [vmem:[#allocation3] sm:$0xff] %vm20, 0.0
    $region17: #{tpu_custom_call.1} parent=1 // pred_fallthru
      _
    %v23 = vld [vmem:[%s0] sm:$0xf]
    %v24 = vld [vmem:[%s1] sm:$0xf]
    %v25 = vld [vmem:[%s1 + $0x4] sm:$0xf]
    %v26 = vld [vmem:[%s1 + $0x8] sm:$0xf]
    %v27 = vld [vmem:[%s1 + $0xc] sm:$0xf]
    %v28 = vld [vmem:[%s1 + $0x10] sm:$0xf]
    %v29 = vld [vmem:[%s1 + $0x14] sm:$0xf]
    %v30 = vld [vmem:[%s1 + $0x18] sm:$0xf]
    %v31 = vld [vmem:[%s1 + $0x1c] sm:$0xf]
    %v32 = vld [vmem:[%s1 + $0x20] sm:$0xf]
    %v33 = vld [vmem:[%s1 + $0x24] sm:$0xf]
    %v34 = vld [vmem:[%s1 + $0x28] sm:$0xf]
    %v35 = vld [vmem:[%s1 + $0x2c] sm:$0xf]
    %v36 = vld [vmem:[%s1 + $0x30] sm:$0xf]
    %v37 = vld [vmem:[%s1 + $0x34] sm:$0xf]
    %v38 = vld [vmem:[%s1 + $0x38] sm:$0xf]
    %v39 = vld [vmem:[%s1 + $0x3c] sm:$0xf]
    %v40 = vld [vmem:[%s1 + $0x40] sm:$0xf]
    %v41 = vld [vmem:[%s1 + $0x44] sm:$0xf]
    %v42 = vld [vmem:[%s1 + $0x48] sm:$0xf]
    %v43 = vld [vmem:[%s1 + $0x4c] sm:$0xf]
    %v44 = vld [vmem:[%s1 + $0x50] sm:$0xf]
    %v45 = vld [vmem:[%s1 + $0x54] sm:$0xf]
    %v46 = vld [vmem:[%s1 + $0x58] sm:$0xf]
    %v47 = vld [vmem:[%s1 + $0x5c] sm:$0xf]
    %v48 = vld [vmem:[%s1 + $0x60] sm:$0xf]
    %v49 = vld [vmem:[%s1 + $0x64] sm:$0xf]
    %v50 = vld [vmem:[%s1 + $0x68] sm:$0xf]
    %v51 = vld [vmem:[%s1 + $0x6c] sm:$0xf]
    %v52 = vld [vmem:[%s1 + $0x70] sm:$0xf]
    %v53 = vld [vmem:[%s1 + $0x74] sm:$0xf]
    %v54 = vld [vmem:[%s1 + $0x78] sm:$0xf]
    %v55 = vld [vmem:[%s1 + $0x7c] sm:$0xf]
    %v56 = vld [vmem:[%s1 + $0x80] sm:$0xf]
    %v57 = vld [vmem:[%s1 + $0x84] sm:$0xf]
    %v58 = vld [vmem:[%s1 + $0x88] sm:$0xf]
    %v59 = vld [vmem:[%s1 + $0x8c] sm:$0xf]
    %v60 = vld [vmem:[%s1 + $0x90] sm:$0xf]
    %v61 = vld [vmem:[%s1 + $0x94] sm:$0xf]
    %v62 = vld [vmem:[%s1 + $0x98] sm:$0xf]
    %v63 = vld [vmem:[%s1 + $0x9c] sm:$0xf]
    %v64 = vld [vmem:[%s1 + $0xa0] sm:$0xf]
    %v65 = vld [vmem:[%s1 + $0xa4] sm:$0xf]
    %v66 = vld [vmem:[%s1 + $0xa8] sm:$0xf]
    %v67 = vld [vmem:[%s1 + $0xac] sm:$0xf]
    %v68 = vld [vmem:[%s1 + $0xb0] sm:$0xf]
    %v69 = vld [vmem:[%s1 + $0xb4] sm:$0xf]
    %v70 = vld [vmem:[%s1 + $0xb8] sm:$0xf]
    %v71 = vld [vmem:[%s1 + $0xbc] sm:$0xf]
    %v72 = vld [vmem:[%s1 + $0xc0] sm:$0xf]
    %v73 = vld [vmem:[%s1 + $0xc4] sm:$0xf]
    %v74 = vld [vmem:[%s1 + $0xc8] sm:$0xf]
    %v75 = vld [vmem:[%s1 + $0xcc] sm:$0xf]
    %v76 = vld [vmem:[%s1 + $0xd0] sm:$0xf]
    %v77 = vld [vmem:[%s1 + $0xd4] sm:$0xf]
    %v78 = vld [vmem:[%s1 + $0xd8] sm:$0xf]
    %v79 = vld [vmem:[%s1 + $0xdc] sm:$0xf]
    %v80 = vld [vmem:[%s1 + $0xe0] sm:$0xf]
    %v81 = vld [vmem:[%s1 + $0xe4] sm:$0xf]
    %v82 = vld [vmem:[%s1 + $0xe8] sm:$0xf]
    %v83 = vld [vmem:[%s1 + $0xec] sm:$0xf]
    %v84 = vld [vmem:[%s1 + $0xf0] sm:$0xf]
    %v85 = vld [vmem:[%s1 + $0xf4] sm:$0xf]
    %v86 = vld [vmem:[%s1 + $0xf8] sm:$0xf]
    %v87 = vld [vmem:[%s1 + $0xfc] sm:$0xf]
    %v88 = vld [vmem:[%s2] sm:$0xf]
    %v90 = vlaneseq
    %v91 = vshrl.u32 %v90, 7
    %v92 = vsub.s32 0, %v91
    %v93 = vrot.slane %v88, %v92
    %v94 = vlaneseq
    %v95 = vshrl.u32 %v94, 7
    %v96 = vsub.s32 1, %v95
    %v97 = vrot.slane %v88, %v96
    %v98 = vlaneseq
    %v99 = vshrl.u32 %v98, 7
    %v100 = vsub.s32 2, %v99
    %v101 = vrot.slane %v88, %v100
    %v102 = vlaneseq
    %v103 = vshrl.u32 %v102, 7
    %v104 = vsub.s32 3, %v103
    %v105 = vrot.slane %v88, %v104
    %v174 = vunpack.c.l.b16 %v24
    %v175 = vunpack.c.l.b16 %v25
    %v176 = vunpack.c.l.b16 %v26
    %v177 = vunpack.c.l.b16 %v27
    %v178 = vunpack.c.l.b16 %v28
    %v179 = vunpack.c.l.b16 %v29
    %v180 = vunpack.c.l.b16 %v30
    %v181 = vunpack.c.l.b16 %v31
    %v182 = vunpack.c.l.b16 %v32
    %v183 = vunpack.c.l.b16 %v33
    %v184 = vunpack.c.l.b16 %v34
    %v185 = vunpack.c.l.b16 %v35
    %v186 = vunpack.c.l.b16 %v36
    %v187 = vunpack.c.l.b16 %v37
    %v188 = vunpack.c.l.b16 %v38
    %v189 = vunpack.c.l.b16 %v39
    %v190 = vunpack.c.l.b16 %v40
    %v191 = vunpack.c.l.b16 %v41
    %v192 = vunpack.c.l.b16 %v42
    %v193 = vunpack.c.l.b16 %v43
    %v194 = vunpack.c.l.b16 %v44
    %v195 = vunpack.c.l.b16 %v45
    %v196 = vunpack.c.l.b16 %v46
    %v197 = vunpack.c.l.b16 %v47
    %v198 = vunpack.c.l.b16 %v48
    %v199 = vunpack.c.l.b16 %v49
    %v200 = vunpack.c.l.b16 %v50
    %v201 = vunpack.c.l.b16 %v51
    %v202 = vunpack.c.l.b16 %v52
    %v203 = vunpack.c.l.b16 %v53
    %v204 = vunpack.c.l.b16 %v54
    %v205 = vunpack.c.l.b16 %v55
    %v206 = vunpack.c.l.b16 %v56
    %v207 = vunpack.c.l.b16 %v57
    %v208 = vunpack.c.l.b16 %v58
    %v209 = vunpack.c.l.b16 %v59
    %v210 = vunpack.c.l.b16 %v60
    %v211 = vunpack.c.l.b16 %v61
    %v212 = vunpack.c.l.b16 %v62
    %v213 = vunpack.c.l.b16 %v63
    %v214 = vunpack.c.l.b16 %v64
    %v215 = vunpack.c.l.b16 %v65
    %v216 = vunpack.c.l.b16 %v66
    %v217 = vunpack.c.l.b16 %v67
    %v218 = vunpack.c.l.b16 %v68
    %v219 = vunpack.c.l.b16 %v69
    %v220 = vunpack.c.l.b16 %v70
    %v221 = vunpack.c.l.b16 %v71
    %v222 = vunpack.c.l.b16 %v72
    %v223 = vunpack.c.l.b16 %v73
    %v224 = vunpack.c.l.b16 %v74
    %v225 = vunpack.c.l.b16 %v75
    %v226 = vunpack.c.l.b16 %v76
    %v227 = vunpack.c.l.b16 %v77
    %v228 = vunpack.c.l.b16 %v78
    %v229 = vunpack.c.l.b16 %v79
    %v230 = vunpack.c.l.b16 %v80
    %v231 = vunpack.c.l.b16 %v81
    %v232 = vunpack.c.l.b16 %v82
    %v233 = vunpack.c.l.b16 %v83
    %v234 = vunpack.c.l.b16 %v84
    %v235 = vunpack.c.l.b16 %v85
    %v236 = vunpack.c.l.b16 %v86
    %v237 = vunpack.c.l.b16 %v87
    %v238 = vpack.c.b16 %v175, %v174
    %v239 = vpack.c.b16 %v177, %v176
    %v240 = vpack.c.b16 %v179, %v178
    %v241 = vpack.c.b16 %v181, %v180
    %v242 = vpack.c.b16 %v183, %v182
    %v243 = vpack.c.b16 %v185, %v184
    %v244 = vpack.c.b16 %v187, %v186
    %v245 = vpack.c.b16 %v189, %v188
    %v246 = vpack.c.b16 %v191, %v190
    %v247 = vpack.c.b16 %v193, %v192
    %v248 = vpack.c.b16 %v195, %v194
    %v249 = vpack.c.b16 %v197, %v196
    %v250 = vpack.c.b16 %v199, %v198
    %v251 = vpack.c.b16 %v201, %v200
    %v252 = vpack.c.b16 %v203, %v202
    %v253 = vpack.c.b16 %v205, %v204
    %v254 = vpack.c.b16 %v207, %v206
    %v255 = vpack.c.b16 %v209, %v208
    %v256 = vpack.c.b16 %v211, %v210
    %v257 = vpack.c.b16 %v213, %v212
    %v258 = vpack.c.b16 %v215, %v214
    %v259 = vpack.c.b16 %v217, %v216
    %v260 = vpack.c.b16 %v219, %v218
    %v261 = vpack.c.b16 %v221, %v220
    %v262 = vpack.c.b16 %v223, %v222
    %v263 = vpack.c.b16 %v225, %v224
    %v264 = vpack.c.b16 %v227, %v226
    %v265 = vpack.c.b16 %v229, %v228
    %v266 = vpack.c.b16 %v231, %v230
    %v267 = vpack.c.b16 %v233, %v232
    %v268 = vpack.c.b16 %v235, %v234
    %v269 = vpack.c.b16 %v237, %v236
    %vm270 = vcmask 523264
    %v272 = vsel %vm270, %v23, 0
    %v275 = vsel %vm270, %v238, 0
    %v278 = vsel %vm270, %v239, 0
    %v281 = vsel %vm270, %v240, 0
    %v284 = vsel %vm270, %v241, 0
    %v287 = vsel %vm270, %v242, 0
    %v290 = vsel %vm270, %v243, 0
    %v293 = vsel %vm270, %v244, 0
    %v296 = vsel %vm270, %v245, 0
    %v299 = vsel %vm270, %v246, 0
    %v302 = vsel %vm270, %v247, 0
    %v305 = vsel %vm270, %v248, 0
    %v308 = vsel %vm270, %v249, 0
    %v311 = vsel %vm270, %v250, 0
    %v314 = vsel %vm270, %v251, 0
    %v317 = vsel %vm270, %v252, 0
    %v320 = vsel %vm270, %v253, 0
    %v323 = vsel %vm270, %v254, 0
    %v326 = vsel %vm270, %v255, 0
    %v329 = vsel %vm270, %v256, 0
    %v332 = vsel %vm270, %v257, 0
    %v335 = vsel %vm270, %v258, 0
    %v338 = vsel %vm270, %v259, 0
    %v341 = vsel %vm270, %v260, 0
    %v344 = vsel %vm270, %v261, 0
    %v347 = vsel %vm270, %v262, 0
    %v350 = vsel %vm270, %v263, 0
    %v353 = vsel %vm270, %v264, 0
    %v356 = vsel %vm270, %v265, 0
    %v359 = vsel %vm270, %v266, 0
    %v362 = vsel %vm270, %v267, 0
    %v365 = vsel %vm270, %v268, 0
    %v368 = vsel %vm270, %v269, 0
    %370 = vmatprep.subr.bf16.mxu0 0
    %371 = vmatpush1.bf16.xpose.msra.mxu0 %v296
    %372 = vmatprep.subr.bf16.mxu0 0
    %373 = vmatpush1.bf16.xpose.msra.mxu0 %v293
    %374 = vmatprep.subr.bf16.mxu0 0
    %375 = vmatpush1.bf16.xpose.msra.mxu0 %v290
    %376 = vmatprep.subr.bf16.mxu0 0
    %377 = vmatpush1.bf16.xpose.msra.mxu0 %v287
    %378 = vmatprep.subr.bf16.mxu0 0
    %379 = vmatpush1.bf16.xpose.msra.mxu0 %v284
    %380 = vmatprep.subr.bf16.mxu0 0
    %381 = vmatpush1.bf16.xpose.msra.mxu0 %v281
    %382 = vmatprep.subr.bf16.mxu0 0
    %383 = vmatpush1.bf16.xpose.msra.mxu0 %v278
    %384 = vmatprep.subr.bf16.mxu0 0
    %385 = vmatpush1.bf16.xpose.msra.mxu0 %v275
    %386 = vmatprep.subr.bf16.mxu0 0
    %387 = vmatpush2.bf16.xpose.msra.mxu0 %v320
    %388 = vmatprep.subr.bf16.mxu0 0
    %389 = vmatpush2.bf16.xpose.msra.mxu0 %v317
    %390 = vmatprep.subr.bf16.mxu0 0
    %391 = vmatpush2.bf16.xpose.msra.mxu0 %v314
    %392 = vmatprep.subr.bf16.mxu0 0
    %393 = vmatpush2.bf16.xpose.msra.mxu0 %v311
    %394 = vmatprep.subr.bf16.mxu0 0
    %395 = vmatpush2.bf16.xpose.msra.mxu0 %v308
    %396 = vmatprep.subr.bf16.mxu0 0
    %397 = vmatpush2.bf16.xpose.msra.mxu0 %v305
    %398 = vmatprep.subr.bf16.mxu0 0
    %399 = vmatpush2.bf16.xpose.msra.mxu0 %v302
    %400 = vmatprep.subr.bf16.mxu0 0
    %401 = vmatpush2.bf16.xpose.msra.mxu0 %v299
    %402 = vmatprep.mubr.bf16.mxu0 0
    %403 = vmatmul.mubr.bf16.gmra.mxu0 %v272
    %v404 = vpop.f32.mrf.mxu0
    %v405 = vadd.f32 %v93, %v404
    %v406 = vpop.f32.mrf.mxu0
    %v407 = vadd.f32 %v97, %v406
    %v408 = vpop.f32.mrf.mxu0
    %v409 = vpop.f32.mrf.mxu0
    %410 = vdwg.mxu0
    %411 = vmatprep.subr.bf16.mxu0 0
    %412 = vmatpush1.bf16.xpose.msra.mxu0 %v344
    %413 = vmatprep.subr.bf16.mxu0 0
    %414 = vmatpush1.bf16.xpose.msra.mxu0 %v341
    %415 = vmatprep.subr.bf16.mxu0 0
    %416 = vmatpush1.bf16.xpose.msra.mxu0 %v338
    %417 = vmatprep.subr.bf16.mxu0 0
    %418 = vmatpush1.bf16.xpose.msra.mxu0 %v335
    %419 = vmatprep.subr.bf16.mxu0 0
    %420 = vmatpush1.bf16.xpose.msra.mxu0 %v332
    %421 = vmatprep.subr.bf16.mxu0 0
    %422 = vmatpush1.bf16.xpose.msra.mxu0 %v329
    %423 = vmatprep.subr.bf16.mxu0 0
    %424 = vmatpush1.bf16.xpose.msra.mxu0 %v326
    %425 = vmatprep.subr.bf16.mxu0 0
    %426 = vmatpush1.bf16.xpose.msra.mxu0 %v323
    %427 = vmatprep.subr.bf16.mxu0 0
    %428 = vmatpush2.bf16.xpose.msra.mxu0 %v368
    %429 = vmatprep.subr.bf16.mxu0 0
    %430 = vmatpush2.bf16.xpose.msra.mxu0 %v365
    %431 = vmatprep.subr.bf16.mxu0 0
    %432 = vmatpush2.bf16.xpose.msra.mxu0 %v362
    %433 = vmatprep.subr.bf16.mxu0 0
    %434 = vmatpush2.bf16.xpose.msra.mxu0 %v359
    %435 = vmatprep.subr.bf16.mxu0 0
    %436 = vmatpush2.bf16.xpose.msra.mxu0 %v356
    %437 = vmatprep.subr.bf16.mxu0 0
    %438 = vmatpush2.bf16.xpose.msra.mxu0 %v353
    %439 = vmatprep.subr.bf16.mxu0 0
    %440 = vmatpush2.bf16.xpose.msra.mxu0 %v350
    %441 = vmatprep.subr.bf16.mxu0 0
    %442 = vmatpush2.bf16.xpose.msra.mxu0 %v347
    %443 = vmatprep.mubr.bf16.mxu0 0
    %444 = vmatmul.mubr.bf16.gmra.mxu0 %v272
    %v445 = vpop.f32.mrf.mxu0
    %v446 = vadd.f32 %v101, %v445
    %v447 = vpop.f32.mrf.mxu0
    %v448 = vadd.f32 %v105, %v447
    %v449 = vpop.f32.mrf.mxu0
    %v450 = vpop.f32.mrf.mxu0
    %451 = vdwg.mxu0
    %v452 = vmax.f32 %v405, %v407
    %v453 = vmax.f32 %v446, %v448
    %v454 = vmax.f32 %v452, %v453
    %455 = vmax.xlane.f32.xlu0 %v454
    %v456 = vpop.xlane.xlu0 %455
    %v457 = vld [vmem:[#allocation2] sm:$0xff]
    %v458 = vmax.f32 %v457, %v456
    %v459 = vld [vmem:[#allocation3] sm:$0xff]
    %v460 = vsub.f32 %v457, %v458
    %v461 = vmul.f32 %v460, 1.442695
    %v462 = vpow.pop %v461
    %v463 = vmul.f32 %v459, %v462
    %465 = vset.pattern.permute.xlu0 0
    %466 = vperm.xlu0 %465, %v458
    %v467 = vpop.permute.xlu0 %466
    %v469 = vsub.f32 %v405, %v467
    %v470 = vsub.f32 %v407, %v467
    %v471 = vsub.f32 %v446, %v467
    %v472 = vsub.f32 %v448, %v467
    %v473 = vmul.f32 %v469, 1.442695
    %v474 = vpow.pop %v473
    %v475 = vmul.f32 %v470, 1.442695
    %v476 = vpow.pop %v475
    %v477 = vmul.f32 %v471, 1.442695
    %v478 = vpow.pop %v477
    %v479 = vmul.f32 %v472, 1.442695
    %v480 = vpow.pop %v479
    %v481 = vadd.f32 %v474, %v476
    %v482 = vadd.f32 %v481, %v478
    %v483 = vadd.f32 %v482, %v480
    %484 = vadd.xlane.f32.xlu0 %v483
    %v485 = vpop.xlane.xlu0 %484
    %v486 = vadd.f32 %v463, %v485
    %vm487 = vcmask 7168
    %488 = vst.msk [vmem:[#allocation3] sm:$0xff] %vm487, %v486
    %489 = vst.msk [vmem:[#allocation2] sm:$0xff] %vm487, %v458
    %s490 = smul.u32 0, 512
    %s491 = sshra.s32 %s490, 7
    %s492 = sand.u32 %s490, 127
    %s493 = smul.addr %s491, 8
    %s494 = scalar_lea.vmem [#allocation4], %s493
    %495 = vst [vmem:[%s494] sm:$0xff] %v405
    %496 = vst [vmem:[%s494 + $0x8] sm:$0xff] %v407
    %497 = vst [vmem:[%s494 + $0x10] sm:$0xff] %v446
    %498 = vst [vmem:[%s494 + $0x18] sm:$0xff] %v448
    // Predicated region
    $region18: #{tpu_custom_call.1} parent=1 // pred_check
      %p499 = pneg %p16
    $region19: #{tpu_custom_call.1} parent=1 // pred_check_branch
      %501 = sbr.rel (%p499) target = $region21
    $region20: #{tpu_custom_call.1} parent=1 // pred_region
      %v502 = vld [vmem:[#allocation4] sm:$0xff]
      %v503 = vld [vmem:[#allocation4 + $0x8] sm:$0xff]
      %v504 = vld [vmem:[#allocation4 + $0x10] sm:$0xff]
      %v505 = vld [vmem:[#allocation4 + $0x18] sm:$0xff]
      %v506 = vld [vmem:[#allocation2] sm:$0xff]
      %v507 = vld [vmem:[#allocation3] sm:$0xff]
      %v508 = vlog2.pop %v507
      %v509 = vmul.f32 %v508, 0.6931472
      %v510 = vadd.f32 %v506, %v509
      %512 = vset.pattern.permute.xlu0 0
      %513 = vperm.xlu0 %512, %v510
      %v514 = vpop.permute.xlu0 %513
      %v516 = vsub.f32 %v502, %v514
      %v517 = vsub.f32 %v503, %v514
      %v518 = vsub.f32 %v504, %v514
      %v519 = vsub.f32 %v505, %v514
      %520 = vst [vmem:[#allocation4] sm:$0xff] %v516
      %521 = vst [vmem:[#allocation4 + $0x8] sm:$0xff] %v517
      %522 = vst [vmem:[#allocation4 + $0x10] sm:$0xff] %v518
      %523 = vst [vmem:[#allocation4 + $0x18] sm:$0xff] %v519
    $region21: #{tpu_custom_call.1} parent=1 // pred_fallthru
      _
    // Predicated region
    $region22: #{tpu_custom_call.1} parent=1 // pred_check
      _
    $region23: #{tpu_custom_call.1} parent=1 // pred_check_branch
      %525 = sbr.rel (0) target = $region25
    $region24: #{tpu_custom_call.1} parent=1 // pred_region
      %s527 = ssub.s32 512, 512
      %528 = vsyncadd [#allocation5], %s527
      %s530 = sshll.u32 [#allocation4], 4
      %s531 = int_to_ptr.vmem [resolvable:$true] %s530
      %533 = dma.vmem_to_hbm [thread:$0]  %s531, 512, %s3, [#allocation5]
    $region25: #{tpu_custom_call.1} parent=1 // pred_fallthru
      _
    // Predicated region
    $region26: #{tpu_custom_call.1} parent=1 // pred_check
      _
    $region27: #{tpu_custom_call.1} parent=1 // pred_check_branch
      %535 = sbr.rel (0) target = $region29
    $region28: #{tpu_custom_call.1} parent=1 // pred_region
      %536 = dma.done [#allocation5], 512
    $region29: #{tpu_custom_call.1} parent=1 // pred_fallthru
      _
    %537 = vsyncpa [#allocation5], 1

</llo_original>
